<compile_context>
chip_gen: v7x
topology: tpu7x:2x2x1
jax: 0.10.0
libtpu: 0.0.40
codegen_flags: <defaults>
</compile_context>

<pallas_src>
import math
import functools

import jax
import jax.numpy as jnp
from jax import lax
from jax.experimental import pallas as pl
from jax.experimental.pallas import tpu as pltpu


NEG_INF = -1e30  # finite "minus infinity": avoids inf-inf NaNs in online softmax


def _pick_tile(n, preferred):
    for t in preferred:
        if t <= n and n % t == 0:
            return t
    return n


def _vmem_limit_bytes():
    # Explicit VMEM budget: enough headroom for wide tiles, capped below the
    # smallest per-core VMEM among v5e/v6e/v7x.
    try:
        cap = pltpu.get_tpu_info().vmem_capacity_bytes
        return min(48 * 1024 * 1024, int(cap * 3 // 4))
    except Exception:
        return 48 * 1024 * 1024


def _compiler_params(dims):
    return pltpu.CompilerParams(
        dimension_semantics=dims,
        vmem_limit_bytes=_vmem_limit_bytes())


# ---------------------------------------------------------------------------
# Kernel 1: fused q/k/v projections + RoPE.
# ---------------------------------------------------------------------------
def _qkv_rope_kernel(x_ref, wq_ref, wk_ref, wv_ref, cos_ref, sin_ref,
                     q_ref, k_ref, v_ref, qacc, kacc, vacc,
                     *, num_heads, num_kv_heads, head_dim):
    j = pl.program_id(2)

    @pl.when(j == 0)
    def _():
        qacc[...] = jnp.zeros_like(qacc)
        kacc[...] = jnp.zeros_like(kacc)
        vacc[...] = jnp.zeros_like(vacc)

    x = x_ref[0]                                              # (ts, th)
    qacc[...] += jnp.dot(x, wq_ref[...], preferred_element_type=jnp.float32)
    kacc[...] += jnp.dot(x, wk_ref[...], preferred_element_type=jnp.float32)
    vacc[...] += jnp.dot(x, wv_ref[...], preferred_element_type=jnp.float32)

    @pl.when(j == pl.num_programs(2) - 1)
    def _():
        cos = cos_ref[...]                                    # (ts, D) f32
        sin = sin_ref[...]
        d = head_dim

        def rope(t):                                          # (ts, D) f32
            t1 = t[:, : d // 2]
            t2 = t[:, d // 2:]
            return t * cos + jnp.concatenate((-t2, t1), axis=-1) * sin

        # RoPE applied once per head; each head slab stored immediately so only
        # one rotated head is ever live on top of the accumulators.
        for h in range(num_heads):
            q_ref[0, h] = rope(qacc[:, h * d:(h + 1) * d]).astype(q_ref.dtype)
        for h in range(num_kv_heads):
            k_ref[0, h] = rope(kacc[:, h * d:(h + 1) * d]).astype(k_ref.dtype)
            v_ref[0, h] = vacc[:, h * d:(h + 1) * d].astype(v_ref.dtype)


# ---------------------------------------------------------------------------
# Kernel 2: flash attention with online softmax (GQA group merged, causal).
# ---------------------------------------------------------------------------
def _flash_attn_kernel(q_ref, k_ref, v_ref, o_ref, m_ref, l_ref, acc_ref,
                       *, tq, tk, n_rep, head_dim, scale):
    qi = pl.program_id(2)
    ki = pl.program_id(3)

    @pl.when(ki == 0)
    def _():
        m_ref[...] = jnp.full_like(m_ref, NEG_INF)
        l_ref[...] = jnp.zeros_like(l_ref)
        acc_ref[...] = jnp.zeros_like(acc_ref)

    # Causal skip: kv tile contributes iff its first key pos <= last query pos.
    @pl.when(ki * tk <= qi * tq + (tq - 1))
    def _():
        k = k_ref[0, 0]                                       # (tk, D)
        v = v_ref[0, 0]                                       # (tk, D)
        # All n_rep query heads of this kv group in ONE operand: (n_rep*tq, D).
        q = q_ref[0].reshape(n_rep * tq, head_dim)

        # In-kernel causal mask for this (q_tile, kv_tile); rows of the merged
        # operand are head-major so the query position is (row mod tq).
        row = lax.broadcasted_iota(jnp.int32, (n_rep * tq, tk), 0)
        col = lax.broadcasted_iota(jnp.int32, (n_rep * tq, tk), 1)
        q_pos = qi * tq + row % tq
        k_pos = ki * tk + col
        causal = k_pos <= q_pos

        s = jnp.dot(q, k.T, preferred_element_type=jnp.float32) * scale
        s = jnp.where(causal, s, NEG_INF)

        m_prev = m_ref[...]                                   # (n_rep*tq, 1)
        m_new = jnp.maximum(m_prev, jnp.max(s, axis=-1, keepdims=True))
        alpha = jnp.exp(m_prev - m_new)
        p = jnp.exp(s - m_new)
        l_ref[...] = alpha * l_ref[...] + jnp.sum(p, axis=-1, keepdims=True)
        acc_ref[...] = alpha * acc_ref[...] + jnp.dot(
            p.astype(v.dtype), v, preferred_element_type=jnp.float32)
        m_ref[...] = m_new

    @pl.when(ki == pl.num_programs(3) - 1)
    def _():
        inv_l = pl.reciprocal(l_ref[...], approx=True)        # EUP slot
        out = (acc_ref[...] * inv_l).reshape(n_rep, tq, head_dim)
        o_ref[0] = out.astype(o_ref.dtype)


# ---------------------------------------------------------------------------
# Kernel 3: output projection, hb heads reduced per grid step.
# ---------------------------------------------------------------------------
def _o_proj_kernel(a_ref, wo_ref, o_ref, acc_ref, *, heads_per_step, head_dim):
    hb = pl.program_id(2)

    @pl.when(hb == 0)
    def _():
        acc_ref[...] = jnp.zeros_like(acc_ref)

    d = head_dim
    for r in range(heads_per_step):                           # static, small
        acc_ref[...] += jnp.dot(a_ref[0, r], wo_ref[r * d:(r + 1) * d, :],
                                preferred_element_type=jnp.float32)

    @pl.when(hb == pl.num_programs(2) - 1)
    def _():
        o_ref[0] = acc_ref[...].astype(o_ref.dtype)


# ---------------------------------------------------------------------------
# Wrapper
# ---------------------------------------------------------------------------
def mistral_attention_pallas(x, wq, wk, wv, wo, cos, sin, *,
                             num_heads, num_kv_heads, head_dim):
    B, S, H = x.shape
    n_rep = num_heads // num_kv_heads
    D = head_dim
    dtype = x.dtype

    ts = _pick_tile(S, (256, 128, 64, 32, 16, 8))     # q / row tile
    tk = _pick_tile(S, (256, 128, 64, 32, 16, 8))     # kv tile
    th = _pick_tile(H, (512, 256, 128))               # hidden contraction tile
    hb = _pick_tile(num_heads, (8, 4, 2, 1))          # heads per o_proj step

    # ---- 1. q/k/v projections + RoPE -> (B, heads, S, D) ----
    q, k, v = pl.pallas_call(
        functools.partial(_qkv_rope_kernel, num_heads=num_heads,
                          num_kv_heads=num_kv_heads, head_dim=D),
        out_shape=(
            jax.ShapeDtypeStruct((B, num_heads, S, D), dtype),
            jax.ShapeDtypeStruct((B, num_kv_heads, S, D), dtype),
            jax.ShapeDtypeStruct((B, num_kv_heads, S, D), dtype),
        ),
        grid_spec=pltpu.PrefetchScalarGridSpec(
            num_scalar_prefetch=0,
            grid=(B, S // ts, H // th),
            in_specs=[
                pl.BlockSpec((1, ts, th), lambda b, i, j: (b, i, j)),        # x
                pl.BlockSpec((th, num_heads * D), lambda b, i, j: (j, 0)),   # wq
                pl.BlockSpec((th, num_kv_heads * D), lambda b, i, j: (j, 0)),# wk
                pl.BlockSpec((th, num_kv_heads * D), lambda b, i, j: (j, 0)),# wv
                pl.BlockSpec((ts, D), lambda b, i, j: (i, 0)),               # cos
                pl.BlockSpec((ts, D), lambda b, i, j: (i, 0)),               # sin
            ],
            out_specs=(
                pl.BlockSpec((1, num_heads, ts, D), lambda b, i, j: (b, 0, i, 0)),
                pl.BlockSpec((1, num_kv_heads, ts, D), lambda b, i, j: (b, 0, i, 0)),
                pl.BlockSpec((1, num_kv_heads, ts, D), lambda b, i, j: (b, 0, i, 0)),
            ),
            scratch_shapes=[
                pltpu.VMEM((ts, num_heads * D), jnp.float32),
                pltpu.VMEM((ts, num_kv_heads * D), jnp.float32),
                pltpu.VMEM((ts, num_kv_heads * D), jnp.float32),
            ],
        ),
        compiler_params=_compiler_params(("parallel", "parallel", "arbitrary")),
    )(x, wq, wk, wv, cos, sin)

    # ---- 2. flash attention (online softmax, in-kernel causal mask, GQA) ----
    attn = pl.pallas_call(
        functools.partial(_flash_attn_kernel, tq=ts, tk=tk, n_rep=n_rep,
                          head_dim=D, scale=1.0 / math.sqrt(D)),
        out_shape=jax.ShapeDtypeStruct((B, num_heads, S, D), dtype),
        grid_spec=pltpu.PrefetchScalarGridSpec(
            num_scalar_prefetch=0,
            grid=(B, num_kv_heads, S // ts, S // tk),
            in_specs=[
                pl.BlockSpec((1, n_rep, ts, D), lambda b, g, i, j: (b, g, i, 0)),  # q
                pl.BlockSpec((1, 1, tk, D), lambda b, g, i, j: (b, g, j, 0)),      # k
                pl.BlockSpec((1, 1, tk, D), lambda b, g, i, j: (b, g, j, 0)),      # v
            ],
            out_specs=pl.BlockSpec((1, n_rep, ts, D),
                                   lambda b, g, i, j: (b, g, i, 0)),
            scratch_shapes=[
                pltpu.VMEM((n_rep * ts, 1), jnp.float32),   # running max
                pltpu.VMEM((n_rep * ts, 1), jnp.float32),   # running sum
                pltpu.VMEM((n_rep * ts, D), jnp.float32),   # output accumulator
            ],
        ),
        compiler_params=_compiler_params(
            ("parallel", "parallel", "parallel", "arbitrary")),
    )(q, k, v)

    # ---- 3. output projection, hb heads reduced per step (wo streamed) ----
    out = pl.pallas_call(
        functools.partial(_o_proj_kernel, heads_per_step=hb, head_dim=D),
        out_shape=jax.ShapeDtypeStruct((B, S, H), dtype),
        grid_spec=pltpu.PrefetchScalarGridSpec(
            num_scalar_prefetch=0,
            grid=(B, S // ts, num_heads // hb),
            in_specs=[
                pl.BlockSpec((1, hb, ts, D), lambda b, i, h: (b, h, i, 0)),  # attn
                pl.BlockSpec((hb * D, H), lambda b, i, h: (h, 0)),           # wo
            ],
            out_specs=pl.BlockSpec((1, ts, H), lambda b, i, h: (b, i, 0)),
            scratch_shapes=[pltpu.VMEM((ts, H), jnp.float32)],
        ),
        compiler_params=_compiler_params(("parallel", "parallel", "arbitrary")),
    )(attn, wo)

    return out


# ---------------------------------------------------------------------------
# Pure-JAX reference (mirrors the PyTorch forward, causal additive mask)
# ---------------------------------------------------------------------------
def _rotate_half(x):
    d = x.shape[-1]
    return jnp.concatenate((-x[..., d // 2:], x[..., : d // 2]), axis=-1)


def reference_attention(x, wq, wk, wv, wo, cos, sin, *,
                        num_heads, num_kv_heads, head_dim):
    B, S, H = x.shape
    n_rep = num_heads // num_kv_heads
    q = (x @ wq).reshape(B, S, num_heads, head_dim).transpose(0, 2, 1, 3)
    k = (x @ wk).reshape(B, S, num_kv_heads, head_dim).transpose(0, 2, 1, 3)
    v = (x @ wv).reshape(B, S, num_kv_heads, head_dim).transpose(0, 2, 1, 3)
    c = cos[None, None]
    s = sin[None, None]
    q = q * c + _rotate_half(q) * s
    k = k * c + _rotate_half(k) * s
    k = jnp.repeat(k, n_rep, axis=1)
    v = jnp.repeat(v, n_rep, axis=1)
    w = jnp.einsum("bhqd,bhkd->bhqk", q, k) / math.sqrt(head_dim)
    causal = jnp.tril(jnp.ones((S, S), dtype=bool))
    w = jnp.where(causal[None, None], w, -1e9)     # additive causal mask
    w = jax.nn.softmax(w.astype(jnp.float32), axis=-1)
    o = jnp.einsum("bhqk,bhkd->bhqd", w, v)
    o = o.transpose(0, 2, 1, 3).reshape(B, S, H)
    return o @ wo


if __name__ == "__main__":
    B, S = 2, 8
    hidden_size = 32
    num_heads = 4
    num_kv_heads = 2
    head_dim = hidden_size // num_heads            # 8
    rope_theta = 10000.0

    key = jax.random.PRNGKey(0)
    k_x, k_q, k_k, k_v, k_o = jax.random.split(key, 5)

    x = jax.random.normal(k_x, (B, S, hidden_size), dtype=jnp.float32)

    def init_w(k, in_f, out_f):
        bound = 1.0 / math.sqrt(in_f)
        return jax.random.uniform(k, (in_f, out_f), jnp.float32, -bound, bound)

    wq = init_w(k_q, hidden_size, num_heads * head_dim)
    wk = init_w(k_k, hidden_size, num_kv_heads * head_dim)
    wv = init_w(k_v, hidden_size, num_kv_heads * head_dim)
    wo = init_w(k_o, num_heads * head_dim, hidden_size)

    # Rotary tables (MistralRotaryEmbedding, position_ids = arange(S)).
    inv_freq = 1.0 / (rope_theta ** (jnp.arange(0, head_dim, 2, dtype=jnp.float32) / head_dim))
    t = jnp.arange(S, dtype=jnp.float32)
    freqs = jnp.einsum("i,j->ij", t, inv_freq)
    emb = jnp.concatenate((freqs, freqs), axis=-1)     # (S, D)
    cos = jnp.cos(emb)
    sin = jnp.sin(emb)

    ref = reference_attention(
        x, wq, wk, wv, wo, cos, sin,
        num_heads=num_heads, num_kv_heads=num_kv_heads, head_dim=head_dim)

    # f32 run (slack in tolerance covers the approx EUP reciprocal).
    out_f32 = mistral_attention_pallas(
        x, wq, wk, wv, wo, cos, sin,
        num_heads=num_heads, num_kv_heads=num_kv_heads, head_dim=head_dim)
    out_f32 = jax.block_until_ready(out_f32)
    assert out_f32.shape == (B, S, hidden_size)
    assert jnp.allclose(out_f32, ref, atol=1e-2, rtol=1e-2), "f32 mismatch vs reference"

    # bf16 run (production dtype: bf16 MXU operands, f32 accumulation).
    out_bf16 = mistral_attention_pallas(
        x.astype(jnp.bfloat16), wq.astype(jnp.bfloat16), wk.astype(jnp.bfloat16),
        wv.astype(jnp.bfloat16), wo.astype(jnp.bfloat16), cos, sin,
        num_heads=num_heads, num_kv_heads=num_kv_heads, head_dim=head_dim)
    out_bf16 = jax.block_until_ready(out_bf16)
    assert jnp.allclose(out_bf16.astype(jnp.float32), ref, atol=2e-1, rtol=2e-1), \
        "bf16 mismatch vs reference"

    print("KERNEL_OK")
</pallas_src>

<mosaic_0001>
module attributes {stable_mosaic.version = 11 : i64} {
  func.func @_qkv_rope_kernel(%arg0: i32, %arg1: i32, %arg2: i32, %arg3: memref<1x8x32xf32, #tpu.memory_space<vmem>>, %arg4: memref<32x32xf32, #tpu.memory_space<vmem>>, %arg5: memref<32x16xf32, #tpu.memory_space<vmem>>, %arg6: memref<32x16xf32, #tpu.memory_space<vmem>>, %arg7: memref<8x8xf32, #tpu.memory_space<vmem>>, %arg8: memref<8x8xf32, #tpu.memory_space<vmem>>, %arg9: memref<1x4x8x8xf32, #tpu.memory_space<vmem>>, %arg10: memref<1x2x8x8xf32, #tpu.memory_space<vmem>>, %arg11: memref<1x2x8x8xf32, #tpu.memory_space<vmem>>, %arg12: memref<8x32xf32, #tpu.memory_space<vmem>>, %arg13: memref<8x16xf32, #tpu.memory_space<vmem>>, %arg14: memref<8x16xf32, #tpu.memory_space<vmem>>) attributes {dimension_semantics = [#tpu.dimension_semantics<parallel>, #tpu.dimension_semantics<parallel>, #tpu.dimension_semantics<arbitrary>], iteration_bounds = array<i64: 2, 1, 1>, scalar_prefetch = 0 : i64, scratch_operands = 3 : i64, tpu.core_type = #tpu.core_type<tc>, window_params = [{transform_indices = @transform_0, window_bounds = array<i64: 1, 8, 32>}, {transform_indices = @transform_1, window_bounds = array<i64: 32, 32>}, {transform_indices = @transform_2, window_bounds = array<i64: 32, 16>}, {transform_indices = @transform_3, window_bounds = array<i64: 32, 16>}, {transform_indices = @transform_4, window_bounds = array<i64: 8, 8>}, {transform_indices = @transform_5, window_bounds = array<i64: 8, 8>}, {transform_indices = @transform_6, window_bounds = array<i64: 1, 4, 8, 8>}, {transform_indices = @transform_7, window_bounds = array<i64: 1, 2, 8, 8>}, {transform_indices = @transform_8, window_bounds = array<i64: 1, 2, 8, 8>}]} {
    %c0_i32 = arith.constant 0 : i32
    %0 = arith.cmpi eq, %arg2, %c0_i32 : i32
    %1 = arith.extui %0 : i1 to i32
    %c0_i32_0 = arith.constant 0 : i32
    %2 = arith.cmpi ne, %1, %c0_i32_0 : i32
    scf.if %2 {
      %cst_25 = arith.constant 0.000000e+00 : f32
      %23 = vector.broadcast %cst_25 : f32 to vector<8x32xf32>
      %c0_26 = arith.constant 0 : index
      %c0_27 = arith.constant 0 : index
      %24 = vector.load %arg12[%c0_26, %c0_27] : memref<8x32xf32, #tpu.memory_space<vmem>>, vector<8x32xf32>
      tpu.vector_store %arg12[%c0_26, %c0_27], %23 {strides = array<i32>} : memref<8x32xf32, #tpu.memory_space<vmem>>, vector<8x32xf32>,
      %cst_28 = arith.constant 0.000000e+00 : f32
      %25 = vector.broadcast %cst_28 : f32 to vector<8x16xf32>
      %c0_29 = arith.constant 0 : index
      %c0_30 = arith.constant 0 : index
      %26 = vector.load %arg13[%c0_29, %c0_30] : memref<8x16xf32, #tpu.memory_space<vmem>>, vector<8x16xf32>
      tpu.vector_store %arg13[%c0_29, %c0_30], %25 {strides = array<i32>} : memref<8x16xf32, #tpu.memory_space<vmem>>, vector<8x16xf32>,
      %cst_31 = arith.constant 0.000000e+00 : f32
      %27 = vector.broadcast %cst_31 : f32 to vector<8x16xf32>
      %c0_32 = arith.constant 0 : index
      %c0_33 = arith.constant 0 : index
      %28 = vector.load %arg14[%c0_32, %c0_33] : memref<8x16xf32, #tpu.memory_space<vmem>>, vector<8x16xf32>
      tpu.vector_store %arg14[%c0_32, %c0_33], %27 {strides = array<i32>} : memref<8x16xf32, #tpu.memory_space<vmem>>, vector<8x16xf32>,
    } else {
    }
    %c0 = arith.constant 0 : index
    %c0_1 = arith.constant 0 : index
    %c0_2 = arith.constant 0 : index
    %3 = vector.load %arg3[%c0, %c0_1, %c0_2] : memref<1x8x32xf32, #tpu.memory_space<vmem>>, vector<1x8x32xf32>
    %4 = vector.shape_cast %3 : vector<1x8x32xf32> to vector<8x32xf32>
    %c0_3 = arith.constant 0 : index
    %c0_4 = arith.constant 0 : index
    %5 = vector.load %arg12[%c0_3, %c0_4] : memref<8x32xf32, #tpu.memory_space<vmem>>, vector<8x32xf32>
    %c0_5 = arith.constant 0 : index
    %c0_6 = arith.constant 0 : index
    %6 = vector.load %arg4[%c0_5, %c0_6] : memref<32x32xf32, #tpu.memory_space<vmem>>, vector<32x32xf32>
    %cst = arith.constant dense<0.000000e+00> : vector<8x32xf32>
    %7 = tpu.matmul %4, %6, %cst {dimension_numbers = #tpu.dot_dimension_numbers<[1], [0], [0], [1], [0, 0, 1, 1], [], []>} : vector<8x32xf32>, vector<32x32xf32>, vector<8x32xf32> -> vector<8x32xf32>
    %8 = arith.addf %5, %7 : vector<8x32xf32>
    %c0_7 = arith.constant 0 : index
    %c0_8 = arith.constant 0 : index
    %9 = vector.load %arg12[%c0_7, %c0_8] : memref<8x32xf32, #tpu.memory_space<vmem>>, vector<8x32xf32>
    tpu.vector_store %arg12[%c0_7, %c0_8], %8 {strides = array<i32>} : memref<8x32xf32, #tpu.memory_space<vmem>>, vector<8x32xf32>,
    %c0_9 = arith.constant 0 : index
    %c0_10 = arith.constant 0 : index
    %10 = vector.load %arg13[%c0_9, %c0_10] : memref<8x16xf32, #tpu.memory_space<vmem>>, vector<8x16xf32>
    %c0_11 = arith.constant 0 : index
    %c0_12 = arith.constant 0 : index
    %11 = vector.load %arg5[%c0_11, %c0_12] : memref<32x16xf32, #tpu.memory_space<vmem>>, vector<32x16xf32>
    %cst_13 = arith.constant dense<0.000000e+00> : vector<8x16xf32>
    %12 = tpu.matmul %4, %11, %cst_13 {dimension_numbers = #tpu.dot_dimension_numbers<[1], [0], [0], [1], [0, 0, 1, 1], [], []>} : vector<8x32xf32>, vector<32x16xf32>, vector<8x16xf32> -> vector<8x16xf32>
    %13 = arith.addf %10, %12 : vector<8x16xf32>
    %c0_14 = arith.constant 0 : index
    %c0_15 = arith.constant 0 : index
    %14 = vector.load %arg13[%c0_14, %c0_15] : memref<8x16xf32, #tpu.memory_space<vmem>>, vector<8x16xf32>
    tpu.vector_store %arg13[%c0_14, %c0_15], %13 {strides = array<i32>} : memref<8x16xf32, #tpu.memory_space<vmem>>, vector<8x16xf32>,
    %c0_16 = arith.constant 0 : index
    %c0_17 = arith.constant 0 : index
    %15 = vector.load %arg14[%c0_16, %c0_17] : memref<8x16xf32, #tpu.memory_space<vmem>>, vector<8x16xf32>
    %c0_18 = arith.constant 0 : index
    %c0_19 = arith.constant 0 : index
    %16 = vector.load %arg6[%c0_18, %c0_19] : memref<32x16xf32, #tpu.memory_space<vmem>>, vector<32x16xf32>
    %cst_20 = arith.constant dense<0.000000e+00> : vector<8x16xf32>
    %17 = tpu.matmul %4, %16, %cst_20 {dimension_numbers = #tpu.dot_dimension_numbers<[1], [0], [0], [1], [0, 0, 1, 1], [], []>} : vector<8x32xf32>, vector<32x16xf32>, vector<8x16xf32> -> vector<8x16xf32>
    %18 = arith.addf %15, %17 : vector<8x16xf32>
    %c0_21 = arith.constant 0 : index
    %c0_22 = arith.constant 0 : index
    %19 = vector.load %arg14[%c0_21, %c0_22] : memref<8x16xf32, #tpu.memory_space<vmem>>, vector<8x16xf32>
    tpu.vector_store %arg14[%c0_21, %c0_22], %18 {strides = array<i32>} : memref<8x16xf32, #tpu.memory_space<vmem>>, vector<8x16xf32>,
    %c0_i32_23 = arith.constant 0 : i32
    %20 = arith.cmpi eq, %arg2, %c0_i32_23 : i32
    %21 = arith.extui %20 : i1 to i32
    %c0_i32_24 = arith.constant 0 : i32
    %22 = arith.cmpi ne, %21, %c0_i32_24 : i32
    scf.if %22 {
      %c0_25 = arith.constant 0 : index
      %c0_26 = arith.constant 0 : index
      %23 = vector.load %arg7[%c0_25, %c0_26] : memref<8x8xf32, #tpu.memory_space<vmem>>, vector<8x8xf32>
      %c0_27 = arith.constant 0 : index
      %c0_28 = arith.constant 0 : index
      %24 = vector.load %arg8[%c0_27, %c0_28] : memref<8x8xf32, #tpu.memory_space<vmem>>, vector<8x8xf32>
      %c0_29 = arith.constant 0 : index
      %c0_30 = arith.constant 0 : index
      %25 = vector.load %arg12[%c0_29, %c0_30] : memref<8x32xf32, #tpu.memory_space<vmem>>, vector<8x8xf32>
      %26 = vector.extract_strided_slice %25 {offsets = [0, 0], sizes = [8, 4], strides = [1, 1]} : vector<8x8xf32> to vector<8x4xf32>
      %27 = vector.extract_strided_slice %25 {offsets = [0, 4], sizes = [8, 4], strides = [1, 1]} : vector<8x8xf32> to vector<8x4xf32>
      %28 = arith.mulf %25, %23 : vector<8x8xf32>
      %cst_31 = arith.constant 0.000000e+00 : f32
      %29 = vector.broadcast %cst_31 : f32 to vector<8x4xf32>
      %30 = arith.subf %29, %27 : vector<8x4xf32>
      %31 = tpu.concatenate %30, %26 in 1 : vector<8x4xf32>, vector<8x4xf32> -> vector<8x8xf32>
      %32 = arith.mulf %31, %24 : vector<8x8xf32>
      %33 = arith.addf %28, %32 : vector<8x8xf32>
      %c0_32 = arith.constant 0 : index
      %c0_33 = arith.constant 0 : index
      %c0_34 = arith.constant 0 : index
      %c0_35 = arith.constant 0 : index
      %34 = vector.load %arg9[%c0_32, %c0_33, %c0_34, %c0_35] : memref<1x4x8x8xf32, #tpu.memory_space<vmem>>, vector<1x1x8x8xf32>
      %35 = vector.shape_cast %34 : vector<1x1x8x8xf32> to vector<8x8xf32>
      %36 = vector.shape_cast %33 : vector<8x8xf32> to vector<1x1x8x8xf32>
      tpu.vector_store %arg9[%c0_32, %c0_33, %c0_34, %c0_35], %36 {strides = array<i32>} : memref<1x4x8x8xf32, #tpu.memory_space<vmem>>, vector<1x1x8x8xf32>,
      %c0_36 = arith.constant 0 : index
      %c8 = arith.constant 8 : index
      %37 = vector.load %arg12[%c0_36, %c8] : memref<8x32xf32, #tpu.memory_space<vmem>>, vector<8x8xf32>
      %38 = vector.extract_strided_slice %37 {offsets = [0, 0], sizes = [8, 4], strides = [1, 1]} : vector<8x8xf32> to vector<8x4xf32>
      %39 = vector.extract_strided_slice %37 {offsets = [0, 4], sizes = [8, 4], strides = [1, 1]} : vector<8x8xf32> to vector<8x4xf32>
      %40 = arith.mulf %37, %23 : vector<8x8xf32>
      %cst_37 = arith.constant 0.000000e+00 : f32
      %41 = vector.broadcast %cst_37 : f32 to vector<8x4xf32>
      %42 = arith.subf %41, %39 : vector<8x4xf32>
      %43 = tpu.concatenate %42, %38 in 1 : vector<8x4xf32>, vector<8x4xf32> -> vector<8x8xf32>
      %44 = arith.mulf %43, %24 : vector<8x8xf32>
      %45 = arith.addf %40, %44 : vector<8x8xf32>
      %c0_38 = arith.constant 0 : index
      %c1 = arith.constant 1 : index
      %c0_39 = arith.constant 0 : index
      %c0_40 = arith.constant 0 : index
      %46 = vector.load %arg9[%c0_38, %c1, %c0_39, %c0_40] : memref<1x4x8x8xf32, #tpu.memory_space<vmem>>, vector<1x1x8x8xf32>
      %47 = vector.shape_cast %46 : vector<1x1x8x8xf32> to vector<8x8xf32>
      %48 = vector.shape_cast %45 : vector<8x8xf32> to vector<1x1x8x8xf32>
      tpu.vector_store %arg9[%c0_38, %c1, %c0_39, %c0_40], %48 {strides = array<i32>} : memref<1x4x8x8xf32, #tpu.memory_space<vmem>>, vector<1x1x8x8xf32>,
      %c0_41 = arith.constant 0 : index
      %c16 = arith.constant 16 : index
      %49 = vector.load %arg12[%c0_41, %c16] : memref<8x32xf32, #tpu.memory_space<vmem>>, vector<8x8xf32>
      %50 = vector.extract_strided_slice %49 {offsets = [0, 0], sizes = [8, 4], strides = [1, 1]} : vector<8x8xf32> to vector<8x4xf32>
      %51 = vector.extract_strided_slice %49 {offsets = [0, 4], sizes = [8, 4], strides = [1, 1]} : vector<8x8xf32> to vector<8x4xf32>
      %52 = arith.mulf %49, %23 : vector<8x8xf32>
      %cst_42 = arith.constant 0.000000e+00 : f32
      %53 = vector.broadcast %cst_42 : f32 to vector<8x4xf32>
      %54 = arith.subf %53, %51 : vector<8x4xf32>
      %55 = tpu.concatenate %54, %50 in 1 : vector<8x4xf32>, vector<8x4xf32> -> vector<8x8xf32>
      %56 = arith.mulf %55, %24 : vector<8x8xf32>
      %57 = arith.addf %52, %56 : vector<8x8xf32>
      %c0_43 = arith.constant 0 : index
      %c2 = arith.constant 2 : index
      %c0_44 = arith.constant 0 : index
      %c0_45 = arith.constant 0 : index
      %58 = vector.load %arg9[%c0_43, %c2, %c0_44, %c0_45] : memref<1x4x8x8xf32, #tpu.memory_space<vmem>>, vector<1x1x8x8xf32>
      %59 = vector.shape_cast %58 : vector<1x1x8x8xf32> to vector<8x8xf32>
      %60 = vector.shape_cast %57 : vector<8x8xf32> to vector<1x1x8x8xf32>
      tpu.vector_store %arg9[%c0_43, %c2, %c0_44, %c0_45], %60 {strides = array<i32>} : memref<1x4x8x8xf32, #tpu.memory_space<vmem>>, vector<1x1x8x8xf32>,
      %c0_46 = arith.constant 0 : index
      %c24 = arith.constant 24 : index
      %61 = vector.load %arg12[%c0_46, %c24] : memref<8x32xf32, #tpu.memory_space<vmem>>, vector<8x8xf32>
      %62 = vector.extract_strided_slice %61 {offsets = [0, 0], sizes = [8, 4], strides = [1, 1]} : vector<8x8xf32> to vector<8x4xf32>
      %63 = vector.extract_strided_slice %61 {offsets = [0, 4], sizes = [8, 4], strides = [1, 1]} : vector<8x8xf32> to vector<8x4xf32>
      %64 = arith.mulf %61, %23 : vector<8x8xf32>
      %cst_47 = arith.constant 0.000000e+00 : f32
      %65 = vector.broadcast %cst_47 : f32 to vector<8x4xf32>
      %66 = arith.subf %65, %63 : vector<8x4xf32>
      %67 = tpu.concatenate %66, %62 in 1 : vector<8x4xf32>, vector<8x4xf32> -> vector<8x8xf32>
      %68 = arith.mulf %67, %24 : vector<8x8xf32>
      %69 = arith.addf %64, %68 : vector<8x8xf32>
      %c0_48 = arith.constant 0 : index
      %c3 = arith.constant 3 : index
      %c0_49 = arith.constant 0 : index
      %c0_50 = arith.constant 0 : index
      %70 = vector.load %arg9[%c0_48, %c3, %c0_49, %c0_50] : memref<1x4x8x8xf32, #tpu.memory_space<vmem>>, vector<1x1x8x8xf32>
      %71 = vector.shape_cast %70 : vector<1x1x8x8xf32> to vector<8x8xf32>
      %72 = vector.shape_cast %69 : vector<8x8xf32> to vector<1x1x8x8xf32>
      tpu.vector_store %arg9[%c0_48, %c3, %c0_49, %c0_50], %72 {strides = array<i32>} : memref<1x4x8x8xf32, #tpu.memory_space<vmem>>, vector<1x1x8x8xf32>,
      %c0_51 = arith.constant 0 : index
      %c0_52 = arith.constant 0 : index
      %73 = vector.load %arg13[%c0_51, %c0_52] : memref<8x16xf32, #tpu.memory_space<vmem>>, vector<8x8xf32>
      %74 = vector.extract_strided_slice %73 {offsets = [0, 0], sizes = [8, 4], strides = [1, 1]} : vector<8x8xf32> to vector<8x4xf32>
      %75 = vector.extract_strided_slice %73 {offsets = [0, 4], sizes = [8, 4], strides = [1, 1]} : vector<8x8xf32> to vector<8x4xf32>
      %76 = arith.mulf %73, %23 : vector<8x8xf32>
      %cst_53 = arith.constant 0.000000e+00 : f32
      %77 = vector.broadcast %cst_53 : f32 to vector<8x4xf32>
      %78 = arith.subf %77, %75 : vector<8x4xf32>
      %79 = tpu.concatenate %78, %74 in 1 : vector<8x4xf32>, vector<8x4xf32> -> vector<8x8xf32>
      %80 = arith.mulf %79, %24 : vector<8x8xf32>
      %81 = arith.addf %76, %80 : vector<8x8xf32>
      %c0_54 = arith.constant 0 : index
      %c0_55 = arith.constant 0 : index
      %c0_56 = arith.constant 0 : index
      %c0_57 = arith.constant 0 : index
      %82 = vector.load %arg10[%c0_54, %c0_55, %c0_56, %c0_57] : memref<1x2x8x8xf32, #tpu.memory_space<vmem>>, vector<1x1x8x8xf32>
      %83 = vector.shape_cast %82 : vector<1x1x8x8xf32> to vector<8x8xf32>
      %84 = vector.shape_cast %81 : vector<8x8xf32> to vector<1x1x8x8xf32>
      tpu.vector_store %arg10[%c0_54, %c0_55, %c0_56, %c0_57], %84 {strides = array<i32>} : memref<1x2x8x8xf32, #tpu.memory_space<vmem>>, vector<1x1x8x8xf32>,
      %c0_58 = arith.constant 0 : index
      %c0_59 = arith.constant 0 : index
      %85 = vector.load %arg14[%c0_58, %c0_59] : memref<8x16xf32, #tpu.memory_space<vmem>>, vector<8x8xf32>
      %c0_60 = arith.constant 0 : index
      %c0_61 = arith.constant 0 : index
      %c0_62 = arith.constant 0 : index
      %c0_63 = arith.constant 0 : index
      %86 = vector.load %arg11[%c0_60, %c0_61, %c0_62, %c0_63] : memref<1x2x8x8xf32, #tpu.memory_space<vmem>>, vector<1x1x8x8xf32>
      %87 = vector.shape_cast %86 : vector<1x1x8x8xf32> to vector<8x8xf32>
      %88 = vector.shape_cast %85 : vector<8x8xf32> to vector<1x1x8x8xf32>
      tpu.vector_store %arg11[%c0_60, %c0_61, %c0_62, %c0_63], %88 {strides = array<i32>} : memref<1x2x8x8xf32, #tpu.memory_space<vmem>>, vector<1x1x8x8xf32>,
      %c0_64 = arith.constant 0 : index
      %c8_65 = arith.constant 8 : index
      %89 = vector.load %arg13[%c0_64, %c8_65] : memref<8x16xf32, #tpu.memory_space<vmem>>, vector<8x8xf32>
      %90 = vector.extract_strided_slice %89 {offsets = [0, 0], sizes = [8, 4], strides = [1, 1]} : vector<8x8xf32> to vector<8x4xf32>
      %91 = vector.extract_strided_slice %89 {offsets = [0, 4], sizes = [8, 4], strides = [1, 1]} : vector<8x8xf32> to vector<8x4xf32>
      %92 = arith.mulf %89, %23 : vector<8x8xf32>
      %cst_66 = arith.constant 0.000000e+00 : f32
      %93 = vector.broadcast %cst_66 : f32 to vector<8x4xf32>
      %94 = arith.subf %93, %91 : vector<8x4xf32>
      %95 = tpu.concatenate %94, %90 in 1 : vector<8x4xf32>, vector<8x4xf32> -> vector<8x8xf32>
      %96 = arith.mulf %95, %24 : vector<8x8xf32>
      %97 = arith.addf %92, %96 : vector<8x8xf32>
      %c0_67 = arith.constant 0 : index
      %c1_68 = arith.constant 1 : index
      %c0_69 = arith.constant 0 : index
      %c0_70 = arith.constant 0 : index
      %98 = vector.load %arg10[%c0_67, %c1_68, %c0_69, %c0_70] : memref<1x2x8x8xf32, #tpu.memory_space<vmem>>, vector<1x1x8x8xf32>
      %99 = vector.shape_cast %98 : vector<1x1x8x8xf32> to vector<8x8xf32>
      %100 = vector.shape_cast %97 : vector<8x8xf32> to vector<1x1x8x8xf32>
      tpu.vector_store %arg10[%c0_67, %c1_68, %c0_69, %c0_70], %100 {strides = array<i32>} : memref<1x2x8x8xf32, #tpu.memory_space<vmem>>, vector<1x1x8x8xf32>,
      %c0_71 = arith.constant 0 : index
      %c8_72 = arith.constant 8 : index
      %101 = vector.load %arg14[%c0_71, %c8_72] : memref<8x16xf32, #tpu.memory_space<vmem>>, vector<8x8xf32>
      %c0_73 = arith.constant 0 : index
      %c1_74 = arith.constant 1 : index
      %c0_75 = arith.constant 0 : index
      %c0_76 = arith.constant 0 : index
      %102 = vector.load %arg11[%c0_73, %c1_74, %c0_75, %c0_76] : memref<1x2x8x8xf32, #tpu.memory_space<vmem>>, vector<1x1x8x8xf32>
      %103 = vector.shape_cast %102 : vector<1x1x8x8xf32> to vector<8x8xf32>
      %104 = vector.shape_cast %101 : vector<8x8xf32> to vector<1x1x8x8xf32>
      tpu.vector_store %arg11[%c0_73, %c1_74, %c0_75, %c0_76], %104 {strides = array<i32>} : memref<1x2x8x8xf32, #tpu.memory_space<vmem>>, vector<1x1x8x8xf32>,
    } else {
    }
    return
  }
  func.func @transform_0(%arg0: i32, %arg1: i32, %arg2: i32) -> (i32, i32, i32) {
    %c0_i32 = arith.constant 0 : i32
    return %arg0, %arg1, %arg2 : i32, i32, i32
  }
  func.func @transform_1(%arg0: i32, %arg1: i32, %arg2: i32) -> (i32, i32) {
    %c0_i32 = arith.constant 0 : i32
    %c0_i32_0 = arith.constant 0 : i32
    return %arg2, %c0_i32 : i32, i32
  }
  func.func @transform_2(%arg0: i32, %arg1: i32, %arg2: i32) -> (i32, i32) {
    %c0_i32 = arith.constant 0 : i32
    %c0_i32_0 = arith.constant 0 : i32
    return %arg2, %c0_i32 : i32, i32
  }
  func.func @transform_3(%arg0: i32, %arg1: i32, %arg2: i32) -> (i32, i32) {
    %c0_i32 = arith.constant 0 : i32
    %c0_i32_0 = arith.constant 0 : i32
    return %arg2, %c0_i32 : i32, i32
  }
  func.func @transform_4(%arg0: i32, %arg1: i32, %arg2: i32) -> (i32, i32) {
    %c0_i32 = arith.constant 0 : i32
    %c0_i32_0 = arith.constant 0 : i32
    return %arg1, %c0_i32 : i32, i32
  }
  func.func @transform_5(%arg0: i32, %arg1: i32, %arg2: i32) -> (i32, i32) {
    %c0_i32 = arith.constant 0 : i32
    %c0_i32_0 = arith.constant 0 : i32
    return %arg1, %c0_i32 : i32, i32
  }
  func.func @transform_6(%arg0: i32, %arg1: i32, %arg2: i32) -> (i32, i32, i32, i32) {
    %c0_i32 = arith.constant 0 : i32
    %c0_i32_0 = arith.constant 0 : i32
    %c0_i32_1 = arith.constant 0 : i32
    return %arg0, %c0_i32, %arg1, %c0_i32_0 : i32, i32, i32, i32
  }
  func.func @transform_7(%arg0: i32, %arg1: i32, %arg2: i32) -> (i32, i32, i32, i32) {
    %c0_i32 = arith.constant 0 : i32
    %c0_i32_0 = arith.constant 0 : i32
    %c0_i32_1 = arith.constant 0 : i32
    return %arg0, %c0_i32, %arg1, %c0_i32_0 : i32, i32, i32, i32
  }
  func.func @transform_8(%arg0: i32, %arg1: i32, %arg2: i32) -> (i32, i32, i32, i32) {
    %c0_i32 = arith.constant 0 : i32
    %c0_i32_0 = arith.constant 0 : i32
    %c0_i32_1 = arith.constant 0 : i32
    return %arg0, %c0_i32, %arg1, %c0_i32_0 : i32, i32, i32, i32
  }
}

</mosaic_0001>

<llo_original>
// kernel: tpu_custom_call.1
$region0: #{tpu_custom_call.1}
  #allocation0 [shape = 'u32[]', space=smem, size = 0x4, offset = 0x4, fixed_abs, tag = 'smem constant byte address 0x4 - core index']
  #allocation1 [shape = 'u32[144,128]{1,0:T(1,128)}', space=vmem, size = 0x12000, scoped, tag = 'internal scratch']
  #allocation2 [shape = 'f32[8,32]{1,0:T(8,128)}', space=vmem, size = 0x1000, scoped, tag = 'scratch operand']
  #allocation3 [shape = 'f32[8,16]{1,0:T(8,128)}', space=vmem, size = 0x1000, scoped, tag = 'scratch operand']
  #allocation4 [shape = 'f32[8,16]{1,0:T(8,128)}', space=vmem, size = 0x1000, scoped, tag = 'scratch operand']
  %s0 = inlined_call_operand.vmem [shape: f32[2,8,32], index: 0, kind: input, shape index: {}]
  %s1 = inlined_call_operand.vmem [shape: f32[32,32], index: 1, kind: input, shape index: {}]
  %s2 = inlined_call_operand.vmem [shape: f32[32,16], index: 2, kind: input, shape index: {}]
  %s3 = inlined_call_operand.vmem [shape: f32[32,16], index: 3, kind: input, shape index: {}]
  %s4 = inlined_call_operand.vmem [shape: f32[8,8], index: 4, kind: input, shape index: {}]
  %s5 = inlined_call_operand.vmem [shape: f32[8,8], index: 5, kind: input, shape index: {}]
  %s6 = inlined_call_operand.hbm [shape: f32[2,4,8,8], index: 6, kind: output, shape index: {0}]
  %s7 = inlined_call_operand.hbm [shape: f32[2,2,8,8], index: 7, kind: output, shape index: {1}]
  %s8 = inlined_call_operand.hbm [shape: f32[2,2,8,8], index: 8, kind: output, shape index: {2}]
  %9 = xla_tuple %s6, %s7, %s8
  %s10 = sld [smem:[#allocation0]]
  $region81: #{tpu_custom_call.1} parent=0
    _
  %s12 = ssub.s32 1, %s10
  %s13 = scalar_select 0, %s12, %s10
  $region1: #{tpu_custom_call.1} parent=0
    #allocation5 [shape = 'u8[32768]{0}', space=vmem, size = 0x8000, scoped, tag = 'output window, operand 0']
    #allocation6 [shape = 's32[2]{0}', space=sflag, size = 0x8, scoped, tag = 'scoped memory for tpu_custom_call.1']
    #allocation7 [shape = 'u8[16384]{0}', space=vmem, size = 0x4000, scoped, tag = 'output window, operand 1']
    #allocation8 [shape = 's32[2]{0}', space=sflag, size = 0x8, scoped, tag = 'scoped memory for tpu_custom_call.1']
    #allocation9 [shape = 'u8[16384]{0}', space=vmem, size = 0x4000, scoped, tag = 'output window, operand 2']
    %14 = vsyncpa [#allocation6], 0
    %s15 = scalar_lea.sflag [#allocation6], 1
    %16 = vsyncpa %s15, 0
    %17 = vsyncpa [#allocation8], 0
    %s18 = scalar_lea.sflag [#allocation8], 1
    %19 = vsyncpa %s18, 0
    loop: start=0, step=1, limit=4
    $region2: #{tpu_custom_call.1} parent=1 // loop_pre_header
      _
    $region3: #{tpu_custom_call.1} parent=1 // loop_header
      %s21 = sphi 0, %s25
      %p22 = scmp.ge.s32.totalorder %s21, 4
      %s28 = sphi 0, %s47
      %s29 = sphi 0, %s43
      %s30 = sphi 0, %s39
      %s31 = sphi 0, %s28
      %s32 = sphi 0, %s29
      %s33 = sphi 0, %s30
      %s34 = sphi 0, %s31
      %s35 = sphi 0, %s32
      %s36 = sphi 0, %s33
      %s54 = sphi 0, %s56
      %s57 = sphi 0, %s54
      %s58 = sphi 0, %s57
      %s74 = sphi 0, %s58
      %s80 = sphi 0, %s82
      %s83 = sphi 0, %s80
      %s84 = sphi 0, %s83
      %s100 = sphi 0, %s84
      %s106 = sphi 0, %s108
      %s109 = sphi 0, %s106
      %s110 = sphi 0, %s109
      %s126 = sphi 0, %s110
      %s132 = sphi 0, %s134
      %s135 = sphi 0, %s132
      %s136 = sphi 0, %s135
      %s152 = sphi 0, %s136
      %s158 = sphi 0, %s160
      %s161 = sphi 0, %s158
      %s162 = sphi 0, %s161
      %s178 = sphi 0, %s162
      %s184 = sphi 0, %s186
      %s187 = sphi 0, %s184
      %s188 = sphi 0, %s187
      %s204 = sphi 0, %s188
      %s212 = sphi 0, %s214
      %s215 = sphi 0, %s212
      %s216 = sphi 0, %s215
      %s232 = sphi 0, %s216
      %s240 = sphi 0, %s242
      %s243 = sphi 0, %s240
      %s244 = sphi 0, %s243
      %s260 = sphi 0, %s244
      %s268 = sphi 0, %s270
      %s271 = sphi 0, %s268
      %s272 = sphi 0, %s271
      %s288 = sphi 0, %s272
    $region4: #{tpu_custom_call.1} parent=1 // loop_header_branch
      %24 = sbr.rel (%p22) target = $region8
    $region5: #{tpu_custom_call.1} parent=1 // loop_body
      %s26 = ssub.s32 %s21, 1
      %s27 = ssub.s32 %s21, 2
      %s37 = sadd.s32 1, %s30
      %p38 = scmp.ge.s32.totalorder %s37, 1
      %s39 = scalar_select %p38, 0, %s37
      %s40 = sadd.s32 1, %s29
      %s41 = scalar_select %p38, %s40, %s29
      %p42 = scmp.ge.s32.totalorder %s41, 1
      %s43 = scalar_select %p42, 0, %s41
      %s44 = sadd.s32 1, %s28
      %s45 = scalar_select %p42, %s44, %s28
      %p46 = scmp.ge.s32.totalorder %s45, 2
      %s47 = scalar_select %p46, 0, %s45
      %s48 = ssub.s32 %s28, %s47
      %s49 = ssub.s32 %s29, %s43
      %s50 = sor.u32 %s48, %s49
      %s51 = ssub.s32 %s30, %s39
      %s52 = sor.u32 %s50, %s51
      %p53 = scmp.eq.s32.totalorder %s52, 0
      %s55 = sadd.s32 %s54, 1
      %s56 = scalar_select %p53, %s54, %s55
      %p59 = pneg %p53
      %p60 = scmp.eq.s32.totalorder %s21, 1
      %p61 = por %p59, %p60
      %p62 = scmp.ne.s32.totalorder %s54, %s57
      %p63 = scmp.eq.s32.totalorder %s21, 0
      %p64 = por %p62, %p63
      %p65 = scmp.ne.s32.totalorder %s54, %s57
      %p66 = scmp.eq.s32.totalorder %s26, 1
      %p67 = por %p65, %p66
      %p68 = scmp.ne.s32.totalorder %s57, %s58
      %p69 = scmp.eq.s32.totalorder %s26, 0
      %p70 = por %p68, %p69
      %p71 = scmp.ne.s32.totalorder %s57, %s58
      %p72 = scmp.eq.s32.totalorder %s27, 1
      %p73 = por %p71, %p72
      %p75 = scmp.ne.s32.totalorder %s58, %s74
      %p76 = scmp.eq.s32.totalorder %s27, 0
      %p77 = por %p75, %p76
      %s78 = ssub.s32 %s30, %s39
      %p79 = scmp.eq.s32.totalorder %s78, 0
      %s81 = sadd.s32 %s80, 1
      %s82 = scalar_select %p79, %s80, %s81
      %p85 = pneg %p79
      %p86 = scmp.eq.s32.totalorder %s21, 1
      %p87 = por %p85, %p86
      %p88 = scmp.ne.s32.totalorder %s80, %s83
      %p89 = scmp.eq.s32.totalorder %s21, 0
      %p90 = por %p88, %p89
      %p91 = scmp.ne.s32.totalorder %s80, %s83
      %p92 = scmp.eq.s32.totalorder %s26, 1
      %p93 = por %p91, %p92
      %p94 = scmp.ne.s32.totalorder %s83, %s84
      %p95 = scmp.eq.s32.totalorder %s26, 0
      %p96 = por %p94, %p95
      %p97 = scmp.ne.s32.totalorder %s83, %s84
      %p98 = scmp.eq.s32.totalorder %s27, 1
      %p99 = por %p97, %p98
      %p101 = scmp.ne.s32.totalorder %s84, %s100
      %p102 = scmp.eq.s32.totalorder %s27, 0
      %p103 = por %p101, %p102
      %s104 = ssub.s32 %s30, %s39
      %p105 = scmp.eq.s32.totalorder %s104, 0
      %s107 = sadd.s32 %s106, 1
      %s108 = scalar_select %p105, %s106, %s107
      %p111 = pneg %p105
      %p112 = scmp.eq.s32.totalorder %s21, 1
      %p113 = por %p111, %p112
      %p114 = scmp.ne.s32.totalorder %s106, %s109
      %p115 = scmp.eq.s32.totalorder %s21, 0
      %p116 = por %p114, %p115
      %p117 = scmp.ne.s32.totalorder %s106, %s109
      %p118 = scmp.eq.s32.totalorder %s26, 1
      %p119 = por %p117, %p118
      %p120 = scmp.ne.s32.totalorder %s109, %s110
      %p121 = scmp.eq.s32.totalorder %s26, 0
      %p122 = por %p120, %p121
      %p123 = scmp.ne.s32.totalorder %s109, %s110
      %p124 = scmp.eq.s32.totalorder %s27, 1
      %p125 = por %p123, %p124
      %p127 = scmp.ne.s32.totalorder %s110, %s126
      %p128 = scmp.eq.s32.totalorder %s27, 0
      %p129 = por %p127, %p128
      %s130 = ssub.s32 %s30, %s39
      %p131 = scmp.eq.s32.totalorder %s130, 0
      %s133 = sadd.s32 %s132, 1
      %s134 = scalar_select %p131, %s132, %s133
      %p137 = pneg %p131
      %p138 = scmp.eq.s32.totalorder %s21, 1
      %p139 = por %p137, %p138
      %p140 = scmp.ne.s32.totalorder %s132, %s135
      %p141 = scmp.eq.s32.totalorder %s21, 0
      %p142 = por %p140, %p141
      %p143 = scmp.ne.s32.totalorder %s132, %s135
      %p144 = scmp.eq.s32.totalorder %s26, 1
      %p145 = por %p143, %p144
      %p146 = scmp.ne.s32.totalorder %s135, %s136
      %p147 = scmp.eq.s32.totalorder %s26, 0
      %p148 = por %p146, %p147
      %p149 = scmp.ne.s32.totalorder %s135, %s136
      %p150 = scmp.eq.s32.totalorder %s27, 1
      %p151 = por %p149, %p150
      %p153 = scmp.ne.s32.totalorder %s136, %s152
      %p154 = scmp.eq.s32.totalorder %s27, 0
      %p155 = por %p153, %p154
      %s156 = ssub.s32 %s29, %s43
      %p157 = scmp.eq.s32.totalorder %s156, 0
      %s159 = sadd.s32 %s158, 1
      %s160 = scalar_select %p157, %s158, %s159
      %p163 = pneg %p157
      %p164 = scmp.eq.s32.totalorder %s21, 1
      %p165 = por %p163, %p164
      %p166 = scmp.ne.s32.totalorder %s158, %s161
      %p167 = scmp.eq.s32.totalorder %s21, 0
      %p168 = por %p166, %p167
      %p169 = scmp.ne.s32.totalorder %s158, %s161
      %p170 = scmp.eq.s32.totalorder %s26, 1
      %p171 = por %p169, %p170
      %p172 = scmp.ne.s32.totalorder %s161, %s162
      %p173 = scmp.eq.s32.totalorder %s26, 0
      %p174 = por %p172, %p173
      %p175 = scmp.ne.s32.totalorder %s161, %s162
      %p176 = scmp.eq.s32.totalorder %s27, 1
      %p177 = por %p175, %p176
      %p179 = scmp.ne.s32.totalorder %s162, %s178
      %p180 = scmp.eq.s32.totalorder %s27, 0
      %p181 = por %p179, %p180
      %s182 = ssub.s32 %s29, %s43
      %p183 = scmp.eq.s32.totalorder %s182, 0
      %s185 = sadd.s32 %s184, 1
      %s186 = scalar_select %p183, %s184, %s185
      %p189 = pneg %p183
      %p190 = scmp.eq.s32.totalorder %s21, 1
      %p191 = por %p189, %p190
      %p192 = scmp.ne.s32.totalorder %s184, %s187
      %p193 = scmp.eq.s32.totalorder %s21, 0
      %p194 = por %p192, %p193
      %p195 = scmp.ne.s32.totalorder %s184, %s187
      %p196 = scmp.eq.s32.totalorder %s26, 1
      %p197 = por %p195, %p196
      %p198 = scmp.ne.s32.totalorder %s187, %s188
      %p199 = scmp.eq.s32.totalorder %s26, 0
      %p200 = por %p198, %p199
      %p201 = scmp.ne.s32.totalorder %s187, %s188
      %p202 = scmp.eq.s32.totalorder %s27, 1
      %p203 = por %p201, %p202
      %p205 = scmp.ne.s32.totalorder %s188, %s204
      %p206 = scmp.eq.s32.totalorder %s27, 0
      %p207 = por %p205, %p206
      %s208 = ssub.s32 %s28, %s47
      %s209 = ssub.s32 %s29, %s43
      %s210 = sor.u32 %s208, %s209
      %p211 = scmp.eq.s32.totalorder %s210, 0
      %s213 = sadd.s32 %s212, 1
      %s214 = scalar_select %p211, %s212, %s213
      %p217 = pneg %p211
      %p218 = scmp.eq.s32.totalorder %s21, 1
      %p219 = por %p217, %p218
      %p220 = scmp.ne.s32.totalorder %s212, %s215
      %p221 = scmp.eq.s32.totalorder %s21, 0
      %p222 = por %p220, %p221
      %p223 = scmp.ne.s32.totalorder %s212, %s215
      %p224 = scmp.eq.s32.totalorder %s26, 1
      %p225 = por %p223, %p224
      %p226 = scmp.ne.s32.totalorder %s215, %s216
      %p227 = scmp.eq.s32.totalorder %s26, 0
      %p228 = por %p226, %p227
      %p229 = scmp.ne.s32.totalorder %s215, %s216
      %p230 = scmp.eq.s32.totalorder %s27, 1
      %p231 = por %p229, %p230
      %p233 = scmp.ne.s32.totalorder %s216, %s232
      %p234 = scmp.eq.s32.totalorder %s27, 0
      %p235 = por %p233, %p234
      %s236 = ssub.s32 %s28, %s47
      %s237 = ssub.s32 %s29, %s43
      %s238 = sor.u32 %s236, %s237
      %p239 = scmp.eq.s32.totalorder %s238, 0
      %s241 = sadd.s32 %s240, 1
      %s242 = scalar_select %p239, %s240, %s241
      %p245 = pneg %p239
      %p246 = scmp.eq.s32.totalorder %s21, 1
      %p247 = por %p245, %p246
      %p248 = scmp.ne.s32.totalorder %s240, %s243
      %p249 = scmp.eq.s32.totalorder %s21, 0
      %p250 = por %p248, %p249
      %p251 = scmp.ne.s32.totalorder %s240, %s243
      %p252 = scmp.eq.s32.totalorder %s26, 1
      %p253 = por %p251, %p252
      %p254 = scmp.ne.s32.totalorder %s243, %s244
      %p255 = scmp.eq.s32.totalorder %s26, 0
      %p256 = por %p254, %p255
      %p257 = scmp.ne.s32.totalorder %s243, %s244
      %p258 = scmp.eq.s32.totalorder %s27, 1
      %p259 = por %p257, %p258
      %p261 = scmp.ne.s32.totalorder %s244, %s260
      %p262 = scmp.eq.s32.totalorder %s27, 0
      %p263 = por %p261, %p262
      %s264 = ssub.s32 %s28, %s47
      %s265 = ssub.s32 %s29, %s43
      %s266 = sor.u32 %s264, %s265
      %p267 = scmp.eq.s32.totalorder %s266, 0
      %s269 = sadd.s32 %s268, 1
      %s270 = scalar_select %p267, %s268, %s269
      %p273 = pneg %p267
      %p274 = scmp.eq.s32.totalorder %s21, 1
      %p275 = por %p273, %p274
      %p276 = scmp.ne.s32.totalorder %s268, %s271
      %p277 = scmp.eq.s32.totalorder %s21, 0
      %p278 = por %p276, %p277
      %p279 = scmp.ne.s32.totalorder %s268, %s271
      %p280 = scmp.eq.s32.totalorder %s26, 1
      %p281 = por %p279, %p280
      %p282 = scmp.ne.s32.totalorder %s271, %s272
      %p283 = scmp.eq.s32.totalorder %s26, 0
      %p284 = por %p282, %p283
      %p285 = scmp.ne.s32.totalorder %s271, %s272
      %p286 = scmp.eq.s32.totalorder %s27, 1
      %p287 = por %p285, %p286
      %p289 = scmp.ne.s32.totalorder %s272, %s288
      %p290 = scmp.eq.s32.totalorder %s27, 0
      %p291 = por %p289, %p290
      %p292 = scmp.le.s32.totalorder 1, %s21
      %p293 = scmp.lt.s32.totalorder %s21, 3
      %p294 = pnand %p292, %p293
      %p295 = pneg %p294
      // Predicated region
      $region9: #{tpu_custom_call.1} parent=5 // pred_check
        _
      $region10: #{tpu_custom_call.1} parent=5 // pred_check_branch
        %297 = sbr.rel (%p294) target = $region12
      $region11: #{tpu_custom_call.1} parent=5 // pred_region
        %s298 = ssub.s32 %s21, 1
        // Predicated region
        $region13: #{tpu_custom_call.1} parent=11 // pred_check
          %p299 = pneg %p96
        $region14: #{tpu_custom_call.1} parent=11 // pred_check_branch
          %301 = sbr.rel (%p299) target = $region16
        $region15: #{tpu_custom_call.1} parent=11 // pred_region
          %s302 = smul.u32 4, %s33
          %p303 = scmp.lt.s32.totalorder %s302, 3
          %s304 = scalar_select %p303, %s302, 3
          %s305 = smul.addr %s304, 8
          %s306 = scalar_lea.vmem %s1, %s305
          %s307 = smul.u32 4, %s33
        $region16: #{tpu_custom_call.1} parent=11 // pred_fallthru
          _
        // Predicated region
        $region17: #{tpu_custom_call.1} parent=11 // pred_check
          %p308 = pneg %p122
        $region18: #{tpu_custom_call.1} parent=11 // pred_check_branch
          %310 = sbr.rel (%p308) target = $region20
        $region19: #{tpu_custom_call.1} parent=11 // pred_region
          %s311 = smul.u32 4, %s33
          %p312 = scmp.lt.s32.totalorder %s311, 3
          %s313 = scalar_select %p312, %s311, 3
          %s314 = smul.addr %s313, 8
          %s315 = scalar_lea.vmem %s2, %s314
          %s316 = smul.u32 4, %s33
        $region20: #{tpu_custom_call.1} parent=11 // pred_fallthru
          _
        // Predicated region
        $region21: #{tpu_custom_call.1} parent=11 // pred_check
          %p317 = pneg %p148
        $region22: #{tpu_custom_call.1} parent=11 // pred_check_branch
          %319 = sbr.rel (%p317) target = $region24
        $region23: #{tpu_custom_call.1} parent=11 // pred_region
          %s320 = smul.u32 4, %s33
          %p321 = scmp.lt.s32.totalorder %s320, 3
          %s322 = scalar_select %p321, %s320, 3
          %s323 = smul.addr %s322, 8
          %s324 = scalar_lea.vmem %s3, %s323
          %s325 = smul.u32 4, %s33
        $region24: #{tpu_custom_call.1} parent=11 // pred_fallthru
          _
        // Predicated region
        $region25: #{tpu_custom_call.1} parent=11 // pred_check
          %p326 = pneg %p174
        $region26: #{tpu_custom_call.1} parent=11 // pred_check_branch
          %328 = sbr.rel (%p326) target = $region28
        $region27: #{tpu_custom_call.1} parent=11 // pred_region
          %p329 = scmp.lt.s32.totalorder %s32, 0
          %s330 = scalar_select %p329, %s32, 0
          %s331 = smul.addr %s330, 8
          %s332 = scalar_lea.vmem %s4, %s331
        $region28: #{tpu_custom_call.1} parent=11 // pred_fallthru
          _
        // Predicated region
        $region29: #{tpu_custom_call.1} parent=11 // pred_check
          %p333 = pneg %p200
        $region30: #{tpu_custom_call.1} parent=11 // pred_check_branch
          %335 = sbr.rel (%p333) target = $region32
        $region31: #{tpu_custom_call.1} parent=11 // pred_region
          %p336 = scmp.lt.s32.totalorder %s32, 0
          %s337 = scalar_select %p336, %s32, 0
          %s338 = smul.addr %s337, 8
          %s339 = scalar_lea.vmem %s5, %s338
        $region32: #{tpu_custom_call.1} parent=11 // pred_fallthru
          _
      $region12: #{tpu_custom_call.1} parent=5 // pred_fallthru
        _
      %p340 = scmp.lt.s32.totalorder %s21, 2
      // Predicated region
      $region33: #{tpu_custom_call.1} parent=5 // pred_check
        %p341 = pneg %p340
      $region34: #{tpu_custom_call.1} parent=5 // pred_check_branch
        %343 = sbr.rel (%p341) target = $region36
      $region35: #{tpu_custom_call.1} parent=5 // pred_region
        // Predicated region
        $region37: #{tpu_custom_call.1} parent=35 // pred_check
          %p344 = pneg %p64
        $region38: #{tpu_custom_call.1} parent=35 // pred_check_branch
          %346 = sbr.rel (%p344) target = $region40
        $region39: #{tpu_custom_call.1} parent=35 // pred_region
          %p347 = scmp.lt.s32.totalorder %s28, 1
          %s348 = scalar_select %p347, %s28, 1
          %p349 = scmp.lt.s32.totalorder %s29, 0
          %s350 = scalar_select %p349, %s29, 0
          %p351 = scmp.lt.s32.totalorder %s30, 0
          %s352 = scalar_select %p351, %s30, 0
          %s353 = sadd.s32 %s352, %s350
          %s354 = sadd.s32 %s353, %s348
          %s355 = smul.addr %s354, 8
          %s356 = scalar_lea.vmem %s0, %s355
        $region40: #{tpu_custom_call.1} parent=35 // pred_fallthru
          _
      $region36: #{tpu_custom_call.1} parent=5 // pred_fallthru
        _
      %p357 = scmp.le.s32.totalorder 1, %s21
      %p358 = scmp.lt.s32.totalorder %s21, 3
      %p359 = pnand %p357, %p358
      %p360 = pneg %p359
      // Predicated region
      $region41: #{tpu_custom_call.1} parent=5 // pred_check
        _
      $region42: #{tpu_custom_call.1} parent=5 // pred_check_branch
        %362 = sbr.rel (%p359) target = $region44
      $region43: #{tpu_custom_call.1} parent=5 // pred_region
        %s363 = ssub.s32 %s21, 1
        %p364 = scmp.lt.s32.totalorder %s31, 1
        %s365 = scalar_select %p364, %s31, 1
        %p366 = scmp.lt.s32.totalorder %s32, 0
        %s367 = scalar_select %p366, %s32, 0
        %p368 = scmp.lt.s32.totalorder %s33, 0
        %s369 = scalar_select %p368, %s33, 0
        %s370 = sadd.s32 %s369, %s367
        %s371 = sadd.s32 %s370, %s365
        %s372 = smul.addr %s371, 8
        %s373 = scalar_lea.vmem %s0, %s372
        %p374 = pneg %p70
        %p375 = pneg %p67
        %s376 = smul.u32 4, %s33
        %p377 = scmp.lt.s32.totalorder %s376, 3
        %s378 = scalar_select %p377, %s376, 3
        %s379 = smul.addr %s378, 8
        %s380 = scalar_lea.vmem %s1, %s379
        %p381 = pneg %p96
        %p382 = pneg %p93
        %s383 = smul.u32 4, %s33
        %p384 = scmp.lt.s32.totalorder %s383, 3
        %s385 = scalar_select %p384, %s383, 3
        %s386 = smul.addr %s385, 8
        %s387 = scalar_lea.vmem %s2, %s386
        %p388 = pneg %p122
        %p389 = pneg %p119
        %s390 = smul.u32 4, %s33
        %p391 = scmp.lt.s32.totalorder %s390, 3
        %s392 = scalar_select %p391, %s390, 3
        %s393 = smul.addr %s392, 8
        %s394 = scalar_lea.vmem %s3, %s393
        %p395 = pneg %p148
        %p396 = pneg %p145
        %p397 = scmp.lt.s32.totalorder %s32, 0
        %s398 = scalar_select %p397, %s32, 0
        %s399 = smul.addr %s398, 8
        %s400 = scalar_lea.vmem %s4, %s399
        %p401 = pneg %p174
        %p402 = pneg %p171
        %p403 = scmp.lt.s32.totalorder %s32, 0
        %s404 = scalar_select %p403, %s32, 0
        %s405 = smul.addr %s404, 8
        %s406 = scalar_lea.vmem %s5, %s405
        %p407 = pneg %p200
        %p408 = pneg %p197
        %p409 = pneg %p228
        %p410 = pneg %p225
        %s411 = sand.u32 %s215, 1
        %s412 = scalar_lea.sflag [#allocation6], %s411
        %s413 = sand.u32 %s215, 1
        %s414 = smul.addr %s413, 32
        %s415 = scalar_lea.vmem [#allocation5], %s414
        %p416 = pneg %p256
        %p417 = pneg %p253
        %s418 = sand.u32 %s26, 1
        %s419 = scalar_lea.sflag [#allocation8], %s418
        %s420 = sand.u32 %s243, 1
        %s421 = smul.addr %s420, 16
        %s422 = scalar_lea.vmem [#allocation7], %s421
        %p423 = pneg %p284
        %p424 = pneg %p281
        %s425 = sand.u32 %s26, 1
        %s426 = scalar_lea.sflag [#allocation8], %s425
        %s427 = sand.u32 %s271, 1
        %s428 = smul.addr %s427, 16
        %s429 = scalar_lea.vmem [#allocation9], %s428
        %p430 = scmp.lt.s32.totalorder %s31, 1
        %s431 = scalar_select %p430, %s31, 1
        %p432 = scmp.lt.s32.totalorder %s32, 0
        %s433 = scalar_select %p432, %s32, 0
        %p434 = scmp.lt.s32.totalorder %s33, 0
        %s435 = scalar_select %p434, %s33, 0
        %s436 = sadd.s32 %s435, %s433
        %s437 = sadd.s32 %s436, %s431
        %s438 = smul.addr %s437, 8
        %s439 = scalar_lea.vmem %s0, %s438
        %s440 = smul.u32 4, %s33
        %p441 = scmp.lt.s32.totalorder %s440, 3
        %s442 = scalar_select %p441, %s440, 3
        %s443 = smul.addr %s442, 8
        %s444 = scalar_lea.vmem %s1, %s443
        %s445 = smul.u32 4, %s33
        %s446 = smul.u32 4, %s33
        %p447 = scmp.lt.s32.totalorder %s446, 3
        %s448 = scalar_select %p447, %s446, 3
        %s449 = smul.addr %s448, 8
        %s450 = scalar_lea.vmem %s2, %s449
        %s451 = smul.u32 4, %s33
        %s452 = smul.u32 4, %s33
        %p453 = scmp.lt.s32.totalorder %s452, 3
        %s454 = scalar_select %p453, %s452, 3
        %s455 = smul.addr %s454, 8
        %s456 = scalar_lea.vmem %s3, %s455
        %s457 = smul.u32 4, %s33
        %p458 = scmp.lt.s32.totalorder %s32, 0
        %s459 = scalar_select %p458, %s32, 0
        %s460 = smul.addr %s459, 8
        %s461 = scalar_lea.vmem %s4, %s460
        %p462 = scmp.lt.s32.totalorder %s32, 0
        %s463 = scalar_select %p462, %s32, 0
        %s464 = smul.addr %s463, 8
        %s465 = scalar_lea.vmem %s5, %s464
        %p466 = scmp.eq.s32.totalorder %s33, 0
        // Predicated region
        $region45: #{tpu_custom_call.1} parent=43 // pred_check
          %p467 = pneg %p466
        $region46: #{tpu_custom_call.1} parent=43 // pred_check_branch
          %469 = sbr.rel (%p467) target = $region48
        $region47: #{tpu_custom_call.1} parent=43 // pred_region
          %vm470 = vcmask 261120
          %471 = vst.msk [vmem:[#allocation2] sm:$0xff] %vm470, 0.0
          %vm472 = vcmask 130048
          %473 = vst.msk [vmem:[#allocation3] sm:$0xff] %vm472, 0.0
          %474 = vst.msk [vmem:[#allocation4] sm:$0xff] %vm472, 0.0
        $region48: #{tpu_custom_call.1} parent=43 // pred_fallthru
          _
        %v475 = vld [vmem:[%s439] sm:$0xff]
        %v476 = vld [vmem:[#allocation2] sm:$0xff]
        %v477 = vld [vmem:[%s444] sm:$0xff]
        %v478 = vld [vmem:[%s444 + $0x8] sm:$0xff]
        %v479 = vld [vmem:[%s444 + $0x10] sm:$0xff]
        %v480 = vld [vmem:[%s444 + $0x18] sm:$0xff]
        %vm481 = vcmask 261120
        %v483 = vsel %vm481, %v475, 0
        %485 = vmatprep.subr.mxu0 0.0
        %486 = vmatpush1.msra.mxu0 %v477
        %487 = vmatprep.subr.mxu0 0.0
        %488 = vmatpush1.msra.mxu0 %v478
        %489 = vmatprep.subr.mxu0 0.0
        %490 = vmatpush1.msra.mxu0 %v479
        %491 = vmatprep.subr.mxu0 0.0
        %492 = vmatpush1.msra.mxu0 %v480
        %493 = vmatprep.subr.mxu0 0.0
        %494 = vmatpush1.msra.mxu0 0.0
        %495 = vmatprep.subr.mxu0 0.0
        %496 = vmatpush1.msra.mxu0 0.0
        %497 = vmatprep.subr.mxu0 0.0
        %498 = vmatpush1.msra.mxu0 0.0
        %499 = vmatprep.subr.mxu0 0.0
        %500 = vmatpush1.msra.mxu0 0.0
        %501 = vmatprep.subr.mxu0 0.0
        %502 = vmatpush1.msra.mxu0 0.0
        %503 = vmatprep.subr.mxu0 0.0
        %504 = vmatpush1.msra.mxu0 0.0
        %505 = vmatprep.subr.mxu0 0.0
        %506 = vmatpush1.msra.mxu0 0.0
        %507 = vmatprep.subr.mxu0 0.0
        %508 = vmatpush1.msra.mxu0 0.0
        %509 = vmatprep.subr.mxu0 0.0
        %510 = vmatpush1.msra.mxu0 0.0
        %511 = vmatprep.subr.mxu0 0.0
        %512 = vmatpush1.msra.mxu0 0.0
        %513 = vmatprep.subr.mxu0 0.0
        %514 = vmatpush1.msra.mxu0 0.0
        %515 = vmatprep.subr.mxu0 0.0
        %516 = vmatpush1.msra.mxu0 0.0
        %517 = vmatprep.subr.mxu0 0.0
        %518 = vmatpush1.msra.mxu0 0.0
        %519 = vmatprep.subr.mxu0 0.0
        %520 = vmatpush1.msra.mxu0 0.0
        %521 = vmatprep.subr.mxu0 0.0
        %522 = vmatpush1.msra.mxu0 0.0
        %523 = vmatprep.subr.mxu0 0.0
        %524 = vmatpush1.msra.mxu0 0.0
        %525 = vmatprep.subr.mxu0 0.0
        %526 = vmatpush1.msra.mxu0 0.0
        %527 = vmatprep.subr.mxu0 0.0
        %528 = vmatpush1.msra.mxu0 0.0
        %529 = vmatprep.subr.mxu0 0.0
        %530 = vmatpush1.msra.mxu0 0.0
        %531 = vmatprep.subr.mxu0 0.0
        %532 = vmatpush1.msra.mxu0 0.0
        %533 = vmatprep.subr.mxu0 0.0
        %534 = vmatpush1.msra.mxu0 0.0
        %535 = vmatprep.subr.mxu0 0.0
        %536 = vmatpush1.msra.mxu0 0.0
        %537 = vmatprep.subr.mxu0 0.0
        %538 = vmatpush1.msra.mxu0 0.0
        %539 = vmatprep.subr.mxu0 0.0
        %540 = vmatpush1.msra.mxu0 0.0
        %541 = vmatprep.subr.mxu0 0.0
        %542 = vmatpush1.msra.mxu0 0.0
        %543 = vmatprep.subr.mxu0 0.0
        %544 = vmatpush1.msra.mxu0 0.0
        %545 = vmatprep.subr.mxu0 0.0
        %546 = vmatpush1.msra.mxu0 0.0
        %547 = vmatprep.subr.mxu0 0.0
        %548 = vmatpush1.msra.mxu0 0.0
        %549 = vmatprep.mubr.f32.mxu0 0.0
        %550 = vmatmul.mubr.f32.gmra.mrb[0].mxu0 %v483
        %v551 = vpop.f32.mrb[0].mxu0
        %v552 = vadd.f32 0.0, %v551
        %v553 = vpop.f32.mrb[0].mxu0
        %554 = vdwg.mxu0
        %v555 = vadd.f32 %v476, %v552
        %556 = vst.msk [vmem:[#allocation2] sm:$0xff] %vm481, %v555
        %v557 = vld [vmem:[#allocation3] sm:$0xff]
        %v558 = vld [vmem:[%s450] sm:$0xff]
        %v559 = vld [vmem:[%s450 + $0x8] sm:$0xff]
        %v560 = vld [vmem:[%s450 + $0x10] sm:$0xff]
        %v561 = vld [vmem:[%s450 + $0x18] sm:$0xff]
        %562 = vmatprep.subr.mxu0 0.0
        %563 = vmatpush1.msra.mxu0 %v558
        %564 = vmatprep.subr.mxu0 0.0
        %565 = vmatpush1.msra.mxu0 %v559
        %566 = vmatprep.subr.mxu0 0.0
        %567 = vmatpush1.msra.mxu0 %v560
        %568 = vmatprep.subr.mxu0 0.0
        %569 = vmatpush1.msra.mxu0 %v561
        %570 = vmatprep.subr.mxu0 0.0
        %571 = vmatpush1.msra.mxu0 0.0
        %572 = vmatprep.subr.mxu0 0.0
        %573 = vmatpush1.msra.mxu0 0.0
        %574 = vmatprep.subr.mxu0 0.0
        %575 = vmatpush1.msra.mxu0 0.0
        %576 = vmatprep.subr.mxu0 0.0
        %577 = vmatpush1.msra.mxu0 0.0
        %578 = vmatprep.subr.mxu0 0.0
        %579 = vmatpush1.msra.mxu0 0.0
        %580 = vmatprep.subr.mxu0 0.0
        %581 = vmatpush1.msra.mxu0 0.0
        %582 = vmatprep.subr.mxu0 0.0
        %583 = vmatpush1.msra.mxu0 0.0
        %584 = vmatprep.subr.mxu0 0.0
        %585 = vmatpush1.msra.mxu0 0.0
        %586 = vmatprep.subr.mxu0 0.0
        %587 = vmatpush1.msra.mxu0 0.0
        %588 = vmatprep.subr.mxu0 0.0
        %589 = vmatpush1.msra.mxu0 0.0
        %590 = vmatprep.subr.mxu0 0.0
        %591 = vmatpush1.msra.mxu0 0.0
        %592 = vmatprep.subr.mxu0 0.0
        %593 = vmatpush1.msra.mxu0 0.0
        %594 = vmatprep.subr.mxu0 0.0
        %595 = vmatpush1.msra.mxu0 0.0
        %596 = vmatprep.subr.mxu0 0.0
        %597 = vmatpush1.msra.mxu0 0.0
        %598 = vmatprep.subr.mxu0 0.0
        %599 = vmatpush1.msra.mxu0 0.0
        %600 = vmatprep.subr.mxu0 0.0
        %601 = vmatpush1.msra.mxu0 0.0
        %602 = vmatprep.subr.mxu0 0.0
        %603 = vmatpush1.msra.mxu0 0.0
        %604 = vmatprep.subr.mxu0 0.0
        %605 = vmatpush1.msra.mxu0 0.0
        %606 = vmatprep.subr.mxu0 0.0
        %607 = vmatpush1.msra.mxu0 0.0
        %608 = vmatprep.subr.mxu0 0.0
        %609 = vmatpush1.msra.mxu0 0.0
        %610 = vmatprep.subr.mxu0 0.0
        %611 = vmatpush1.msra.mxu0 0.0
        %612 = vmatprep.subr.mxu0 0.0
        %613 = vmatpush1.msra.mxu0 0.0
        %614 = vmatprep.subr.mxu0 0.0
        %615 = vmatpush1.msra.mxu0 0.0
        %616 = vmatprep.subr.mxu0 0.0
        %617 = vmatpush1.msra.mxu0 0.0
        %618 = vmatprep.subr.mxu0 0.0
        %619 = vmatpush1.msra.mxu0 0.0
        %620 = vmatprep.subr.mxu0 0.0
        %621 = vmatpush1.msra.mxu0 0.0
        %622 = vmatprep.subr.mxu0 0.0
        %623 = vmatpush1.msra.mxu0 0.0
        %624 = vmatprep.subr.mxu0 0.0
        %625 = vmatpush1.msra.mxu0 0.0
        %626 = vmatprep.mubr.f32.mxu0 0.0
        %627 = vmatmul.mubr.f32.gmra.mrb[0].mxu0 %v483
        %v628 = vpop.f32.mrb[0].mxu0
        %v629 = vadd.f32 0.0, %v628
        %v630 = vpop.f32.mrb[0].mxu0
        %631 = vdwg.mxu0
        %v632 = vadd.f32 %v557, %v629
        %vm633 = vcmask 130048
        %634 = vst.msk [vmem:[#allocation3] sm:$0xff] %vm633, %v632
        %v635 = vld [vmem:[#allocation4] sm:$0xff]
        %v636 = vld [vmem:[%s456] sm:$0xff]
        %v637 = vld [vmem:[%s456 + $0x8] sm:$0xff]
        %v638 = vld [vmem:[%s456 + $0x10] sm:$0xff]
        %v639 = vld [vmem:[%s456 + $0x18] sm:$0xff]
        %640 = vmatprep.subr.mxu0 0.0
        %641 = vmatpush1.msra.mxu0 %v636
        %642 = vmatprep.subr.mxu0 0.0
        %643 = vmatpush1.msra.mxu0 %v637
        %644 = vmatprep.subr.mxu0 0.0
        %645 = vmatpush1.msra.mxu0 %v638
        %646 = vmatprep.subr.mxu0 0.0
        %647 = vmatpush1.msra.mxu0 %v639
        %648 = vmatprep.subr.mxu0 0.0
        %649 = vmatpush1.msra.mxu0 0.0
        %650 = vmatprep.subr.mxu0 0.0
        %651 = vmatpush1.msra.mxu0 0.0
        %652 = vmatprep.subr.mxu0 0.0
        %653 = vmatpush1.msra.mxu0 0.0
        %654 = vmatprep.subr.mxu0 0.0
        %655 = vmatpush1.msra.mxu0 0.0
        %656 = vmatprep.subr.mxu0 0.0
        %657 = vmatpush1.msra.mxu0 0.0
        %658 = vmatprep.subr.mxu0 0.0
        %659 = vmatpush1.msra.mxu0 0.0
        %660 = vmatprep.subr.mxu0 0.0
        %661 = vmatpush1.msra.mxu0 0.0
        %662 = vmatprep.subr.mxu0 0.0
        %663 = vmatpush1.msra.mxu0 0.0
        %664 = vmatprep.subr.mxu0 0.0
        %665 = vmatpush1.msra.mxu0 0.0
        %666 = vmatprep.subr.mxu0 0.0
        %667 = vmatpush1.msra.mxu0 0.0
        %668 = vmatprep.subr.mxu0 0.0
        %669 = vmatpush1.msra.mxu0 0.0
        %670 = vmatprep.subr.mxu0 0.0
        %671 = vmatpush1.msra.mxu0 0.0
        %672 = vmatprep.subr.mxu0 0.0
        %673 = vmatpush1.msra.mxu0 0.0
        %674 = vmatprep.subr.mxu0 0.0
        %675 = vmatpush1.msra.mxu0 0.0
        %676 = vmatprep.subr.mxu0 0.0
        %677 = vmatpush1.msra.mxu0 0.0
        %678 = vmatprep.subr.mxu0 0.0
        %679 = vmatpush1.msra.mxu0 0.0
        %680 = vmatprep.subr.mxu0 0.0
        %681 = vmatpush1.msra.mxu0 0.0
        %682 = vmatprep.subr.mxu0 0.0
        %683 = vmatpush1.msra.mxu0 0.0
        %684 = vmatprep.subr.mxu0 0.0
        %685 = vmatpush1.msra.mxu0 0.0
        %686 = vmatprep.subr.mxu0 0.0
        %687 = vmatpush1.msra.mxu0 0.0
        %688 = vmatprep.subr.mxu0 0.0
        %689 = vmatpush1.msra.mxu0 0.0
        %690 = vmatprep.subr.mxu0 0.0
        %691 = vmatpush1.msra.mxu0 0.0
        %692 = vmatprep.subr.mxu0 0.0
        %693 = vmatpush1.msra.mxu0 0.0
        %694 = vmatprep.subr.mxu0 0.0
        %695 = vmatpush1.msra.mxu0 0.0
        %696 = vmatprep.subr.mxu0 0.0
        %697 = vmatpush1.msra.mxu0 0.0
        %698 = vmatprep.subr.mxu0 0.0
        %699 = vmatpush1.msra.mxu0 0.0
        %700 = vmatprep.subr.mxu0 0.0
        %701 = vmatpush1.msra.mxu0 0.0
        %702 = vmatprep.subr.mxu0 0.0
        %703 = vmatpush1.msra.mxu0 0.0
        %704 = vmatprep.mubr.f32.mxu0 0.0
        %705 = vmatmul.mubr.f32.gmra.mrb[0].mxu0 %v483
        %v706 = vpop.f32.mrb[0].mxu0
        %v707 = vadd.f32 0.0, %v706
        %v708 = vpop.f32.mrb[0].mxu0
        %709 = vdwg.mxu0
        %v710 = vadd.f32 %v635, %v707
        %711 = vst.msk [vmem:[#allocation4] sm:$0xff] %vm633, %v710
        // Predicated region
        $region49: #{tpu_custom_call.1} parent=43 // pred_check
          %p712 = pneg %p466
        $region50: #{tpu_custom_call.1} parent=43 // pred_check_branch
          %714 = sbr.rel (%p712) target = $region52
        $region51: #{tpu_custom_call.1} parent=43 // pred_region
          %v715 = vld [vmem:[%s461] sm:$0xff]
          %v716 = vld [vmem:[%s465] sm:$0xff]
          %v717 = vld [vmem:[#allocation2] sm:$0xff]
          %v718 = vmul.f32 %v717, %v715
          %v719 = vsub.f32 0.0, %v717
          %721 = vrot.lane.b32.xlu0 %v719, 124
          %v722 = vpop.permute.xlu0 %721
          %725 = vrot.lane.b32.xlu0 %v717, 4
          %v726 = vpop.permute.xlu0 %725
          %vm728 = vcmask 31744
          %v729 = vsel %vm728, %v722, %v726
          %v730 = vmul.f32 %v729, %v716
          %v731 = vadd.f32 %v718, %v730
          %vm732 = vcmask 64512
          %733 = vst.msk [vmem:[%s415] sm:$0xff] %vm732, %v731
          %v734 = vld [vmem:[#allocation2] sm:$0xff]
          %736 = vrot.lane.b32.xlu0 %v715, 8
          %v737 = vpop.permute.xlu0 %736
          %v739 = vmul.f32 %v734, %v737
          %v740 = vsub.f32 0.0, %v734
          %742 = vrot.lane.b32.xlu0 %v740, 116
          %v743 = vpop.permute.xlu0 %742
          %746 = vrot.lane.b32.xlu0 %v734, 124
          %v747 = vpop.permute.xlu0 %746
          %v749 = vsel %vm728, %v743, %v747
          %v750 = vmul.f32 %v749, %v716
          %752 = vrot.lane.b32.xlu0 %v750, 8
          %v753 = vpop.permute.xlu0 %752
          %v755 = vadd.f32 %v739, %v753
          %757 = vrot.lane.b32.xlu0 %v755, 120
          %v758 = vpop.permute.xlu0 %757
          %s760 = scalar_lea.vmem %s415, 8 [#allocation5]
          %761 = vst.msk [vmem:[%s760] sm:$0xff] %vm732, %v758
          %v762 = vld [vmem:[#allocation2] sm:$0xff]
          %763 = vrot.lane.b32.xlu0 %v715, 16
          %v764 = vpop.permute.xlu0 %763
          %v766 = vmul.f32 %v762, %v764
          %v767 = vsub.f32 0.0, %v762
          %769 = vrot.lane.b32.xlu0 %v767, 108
          %v770 = vpop.permute.xlu0 %769
          %773 = vrot.lane.b32.xlu0 %v762, 116
          %v774 = vpop.permute.xlu0 %773
          %v776 = vsel %vm728, %v770, %v774
          %v777 = vmul.f32 %v776, %v716
          %779 = vrot.lane.b32.xlu0 %v777, 16
          %v780 = vpop.permute.xlu0 %779
          %v782 = vadd.f32 %v766, %v780
          %784 = vrot.lane.b32.xlu0 %v782, 112
          %v785 = vpop.permute.xlu0 %784
          %s787 = scalar_lea.vmem %s415, 16 [#allocation5]
          %788 = vst.msk [vmem:[%s787] sm:$0xff] %vm732, %v785
          %v789 = vld [vmem:[#allocation2] sm:$0xff]
          %790 = vrot.lane.b32.xlu0 %v715, 24
          %v791 = vpop.permute.xlu0 %790
          %v793 = vmul.f32 %v789, %v791
          %v794 = vsub.f32 0.0, %v789
          %796 = vrot.lane.b32.xlu0 %v794, 100
          %v797 = vpop.permute.xlu0 %796
          %800 = vrot.lane.b32.xlu0 %v789, 108
          %v801 = vpop.permute.xlu0 %800
          %v803 = vsel %vm728, %v797, %v801
          %v804 = vmul.f32 %v803, %v716
          %806 = vrot.lane.b32.xlu0 %v804, 24
          %v807 = vpop.permute.xlu0 %806
          %v809 = vadd.f32 %v793, %v807
          %811 = vrot.lane.b32.xlu0 %v809, 104
          %v812 = vpop.permute.xlu0 %811
          %s814 = scalar_lea.vmem %s415, 24 [#allocation5]
          %815 = vst.msk [vmem:[%s814] sm:$0xff] %vm732, %v812
          %v816 = vld [vmem:[#allocation3] sm:$0xff]
          %v817 = vmul.f32 %v816, %v715
          %v818 = vsub.f32 0.0, %v816
          %820 = vrot.lane.b32.xlu0 %v818, 124
          %v821 = vpop.permute.xlu0 %820
          %824 = vrot.lane.b32.xlu0 %v816, 4
          %v825 = vpop.permute.xlu0 %824
          %v827 = vsel %vm728, %v821, %v825
          %v828 = vmul.f32 %v827, %v716
          %v829 = vadd.f32 %v817, %v828
          %830 = vst.msk [vmem:[%s422] sm:$0xff] %vm732, %v829
          %v831 = vld [vmem:[#allocation4] sm:$0xff]
          %832 = vst.msk [vmem:[%s429] sm:$0xff] %vm732, %v831
          %v833 = vld [vmem:[#allocation3] sm:$0xff]
          %v834 = vmul.f32 %v833, %v737
          %v835 = vsub.f32 0.0, %v833
          %837 = vrot.lane.b32.xlu0 %v835, 116
          %v838 = vpop.permute.xlu0 %837
          %841 = vrot.lane.b32.xlu0 %v833, 124
          %v842 = vpop.permute.xlu0 %841
          %v844 = vsel %vm728, %v838, %v842
          %v845 = vmul.f32 %v844, %v716
          %847 = vrot.lane.b32.xlu0 %v845, 8
          %v848 = vpop.permute.xlu0 %847
          %v850 = vadd.f32 %v834, %v848
          %852 = vrot.lane.b32.xlu0 %v850, 120
          %v853 = vpop.permute.xlu0 %852
          %s855 = scalar_lea.vmem %s422, 8 [#allocation7]
          %856 = vst.msk [vmem:[%s855] sm:$0xff] %vm732, %v853
          %v857 = vld [vmem:[#allocation4] sm:$0xff]
          %859 = vrot.lane.b32.xlu0 %v857, 120
          %v860 = vpop.permute.xlu0 %859
          %s862 = scalar_lea.vmem %s429, 8 [#allocation9]
          %863 = vst.msk [vmem:[%s862] sm:$0xff] %vm732, %v860
        $region52: #{tpu_custom_call.1} parent=43 // pred_fallthru
          _
        %s864 = sand.u32 %s215, 1
        %s865 = scalar_lea.sflag [#allocation6], %s864
        %s866 = sand.u32 %s215, 1
        %s867 = smul.addr %s866, 32
        %s868 = scalar_lea.vmem [#allocation5], %s867
        %s869 = sand.u32 %s26, 1
        %s870 = scalar_lea.sflag [#allocation8], %s869
        %s871 = sand.u32 %s243, 1
        %s872 = smul.addr %s871, 16
        %s873 = scalar_lea.vmem [#allocation7], %s872
        %s874 = sand.u32 %s26, 1
        %s875 = scalar_lea.sflag [#allocation8], %s874
        %s876 = sand.u32 %s271, 1
        %s877 = smul.addr %s876, 16
        %s878 = scalar_lea.vmem [#allocation9], %s877
        // Predicated region
        $region53: #{tpu_custom_call.1} parent=43 // pred_check
          %p879 = pneg %p225
        $region54: #{tpu_custom_call.1} parent=43 // pred_check_branch
          %881 = sbr.rel (%p879) target = $region56
        $region55: #{tpu_custom_call.1} parent=43 // pred_region
          %s883 = ssub.s32 512, 512
          %884 = vsyncadd %s865, %s883
          %s885 = smul.addr %s31, 4
          %s886 = sadd.s32 %s32, %s885
          %s887 = smul.addr %s886, 128
          %s888 = scalar_lea.hbm %s6, %s887
          %s889 = sshll.u32 %s868, 4
          %s890 = int_to_ptr.vmem [resolvable:$true] %s889
          %895 = dma.vmem_to_hbm [thread:$0]  %s890, 512, %s888, %s865, 128, 128, 8
        $region56: #{tpu_custom_call.1} parent=43 // pred_fallthru
          _
        // Predicated region
        $region57: #{tpu_custom_call.1} parent=43 // pred_check
          %p896 = pneg %p253
        $region58: #{tpu_custom_call.1} parent=43 // pred_check_branch
          %898 = sbr.rel (%p896) target = $region60
        $region59: #{tpu_custom_call.1} parent=43 // pred_region
          %s900 = ssub.s32 256, 256
          %901 = vsyncadd %s870, %s900
          %s902 = smul.addr %s31, 2
          %s903 = sadd.s32 %s32, %s902
          %s904 = smul.addr %s903, 128
          %s905 = scalar_lea.hbm %s7, %s904
          %s906 = sshll.u32 %s873, 4
          %s907 = int_to_ptr.vmem [resolvable:$true] %s906
          %912 = dma.vmem_to_hbm [thread:$0]  %s907, 256, %s905, %s870, 128, 128, 8
        $region60: #{tpu_custom_call.1} parent=43 // pred_fallthru
          _
        // Predicated region
        $region61: #{tpu_custom_call.1} parent=43 // pred_check
          %p913 = pneg %p281
        $region62: #{tpu_custom_call.1} parent=43 // pred_check_branch
          %915 = sbr.rel (%p913) target = $region64
        $region63: #{tpu_custom_call.1} parent=43 // pred_region
          %s917 = ssub.s32 256, 256
          %918 = vsyncadd %s875, %s917
          %s919 = smul.addr %s31, 2
          %s920 = sadd.s32 %s32, %s919
          %s921 = smul.addr %s920, 128
          %s922 = scalar_lea.hbm %s8, %s921
          %s923 = sshll.u32 %s878, 4
          %s924 = int_to_ptr.vmem [resolvable:$true] %s923
          %929 = dma.vmem_to_hbm [thread:$0]  %s924, 256, %s922, %s875, 128, 128, 8
        $region64: #{tpu_custom_call.1} parent=43 // pred_fallthru
          _
      $region44: #{tpu_custom_call.1} parent=5 // pred_fallthru
        _
      %p930 = scmp.le.s32.totalorder 2, %s21
      // Predicated region
      $region65: #{tpu_custom_call.1} parent=5 // pred_check
        %p931 = pneg %p930
      $region66: #{tpu_custom_call.1} parent=5 // pred_check_branch
        %933 = sbr.rel (%p931) target = $region68
      $region67: #{tpu_custom_call.1} parent=5 // pred_region
        %s934 = ssub.s32 %s21, 2
        // Predicated region
        $region69: #{tpu_custom_call.1} parent=67 // pred_check
          %p935 = pneg %p231
        $region70: #{tpu_custom_call.1} parent=67 // pred_check_branch
          %937 = sbr.rel (%p935) target = $region72
        $region71: #{tpu_custom_call.1} parent=67 // pred_region
          %s938 = sand.u32 %s216, 1
          %s939 = scalar_lea.sflag [#allocation6], %s938
          %s940 = sand.u32 %s216, 1
          %s941 = smul.addr %s940, 32
          %s942 = scalar_lea.vmem [#allocation5], %s941
          %943 = dma.done %s939, 512
        $region72: #{tpu_custom_call.1} parent=67 // pred_fallthru
          _
        // Predicated region
        $region73: #{tpu_custom_call.1} parent=67 // pred_check
          %p944 = pneg %p259
        $region74: #{tpu_custom_call.1} parent=67 // pred_check_branch
          %946 = sbr.rel (%p944) target = $region76
        $region75: #{tpu_custom_call.1} parent=67 // pred_region
          %s947 = sand.u32 %s27, 1
          %s948 = scalar_lea.sflag [#allocation8], %s947
          %s949 = sand.u32 %s244, 1
          %s950 = smul.addr %s949, 16
          %s951 = scalar_lea.vmem [#allocation7], %s950
          %952 = dma.done %s948, 256
        $region76: #{tpu_custom_call.1} parent=67 // pred_fallthru
          _
        // Predicated region
        $region77: #{tpu_custom_call.1} parent=67 // pred_check
          %p953 = pneg %p287
        $region78: #{tpu_custom_call.1} parent=67 // pred_check_branch
          %955 = sbr.rel (%p953) target = $region80
        $region79: #{tpu_custom_call.1} parent=67 // pred_region
          %s956 = sand.u32 %s27, 1
          %s957 = scalar_lea.sflag [#allocation8], %s956
          %s958 = sand.u32 %s272, 1
          %s959 = smul.addr %s958, 16
          %s960 = scalar_lea.vmem [#allocation9], %s959
          %961 = dma.done %s957, 256
        $region80: #{tpu_custom_call.1} parent=67 // pred_fallthru
          _
      $region68: #{tpu_custom_call.1} parent=5 // pred_fallthru
        _
    $region6: #{tpu_custom_call.1} parent=1 // loop_footer
      %s25 = sadd.s32 1, %s21
    $region7: #{tpu_custom_call.1} parent=1 // loop_footer_branch
      %20 = sbr.rel target = $region3
    $region8: #{tpu_custom_call.1} parent=1 // loop_exit
      _
    %962 = vsyncpa [#allocation6], 1
    %s963 = scalar_lea.sflag [#allocation6], 1
    %964 = vsyncpa %s963, 1
    %965 = vsyncpa [#allocation8], 1
    %s966 = scalar_lea.sflag [#allocation8], 1
    %967 = vsyncpa %s966, 1

</llo_original>
